<compile_context>
chip_gen: v6e
topology: v6e:2x2x1
jax: 0.10.0
libtpu: 0.0.40
codegen_flags: <defaults>
</compile_context>

<pallas_src>
import jax
import jax.numpy as jnp
from jax.experimental import pallas as pl
from jax.experimental.pallas import tpu as pltpu


# ----------------------------------------------------------------------------
# Kernels
# ----------------------------------------------------------------------------
def _trelu_kernel_native(alpha_ref, x_ref, o_ref):
    # relu(x - a) + a == max(x, a): one VPU op per vreg, exact (no cancellation).
    o_ref[...] = jnp.maximum(x_ref[...], alpha_ref[0].astype(o_ref.dtype))


def _trelu_kernel_f32(alpha_ref, x_ref, o_ref):
    # v5 path for sub-32-bit inputs (no bf16 VPU): widen, max, narrow at store.
    o_ref[...] = jnp.maximum(x_ref[...].astype(jnp.float32),
                             alpha_ref[0]).astype(o_ref.dtype)


# ----------------------------------------------------------------------------
# Wrapper
# ----------------------------------------------------------------------------
def _round_up(n: int, m: int) -> int:
    return ((n + m - 1) // m) * m


def _device_kind() -> str:
    try:
        return jax.devices()[0].device_kind.lower()
    except Exception:
        return ""


def _trelu_2d(x2: jax.Array, alpha_f32: jax.Array) -> jax.Array:
    """Run the TReLU kernel over a lane-dense (rows, W) view (W % 128 == 0)."""
    rows, W = x2.shape
    dtype = x2.dtype
    itemsize = jnp.dtype(dtype).itemsize
    sublane = 8 * max(1, 4 // itemsize)  # 8 rows/vreg f32, 16 bf16, 32 int8

    kind = _device_kind()
    is_v5 = "v5" in kind
    # v5: 16 MiB scoped-VMEM default and ~0.8 TB/s HBM -> 2 MiB blocks already
    # amortize per-step overhead. v6e/v7x: 32 MiB default, faster HBM -> 4 MiB.
    tile_bytes = (2 if is_v5 else 4) * 1024 * 1024

    if rows <= sublane:
        tm = rows  # block == full array dims (always legal, grid=(1,))
    else:
        tm = max(sublane, (tile_bytes // (W * itemsize)) // sublane * sublane)
        tm = min(tm, (rows // sublane) * sublane)
        # Keep >= ~4 grid steps on large-enough inputs so double-buffering
        # overlaps and both v7x TensorCores pull HBM on the parallel axis.
        if rows >= 4 * sublane:
            tm = min(tm, max(sublane, _round_up(pl.cdiv(rows, 4), sublane)))
    grid = (pl.cdiv(rows, tm),)

    # Native-dtype compute everywhere except sub-32-bit dtypes on v5.
    kernel = _trelu_kernel_f32 if (itemsize < 4 and is_v5) else _trelu_kernel_native

    return pl.pallas_call(
        kernel,
        out_shape=jax.ShapeDtypeStruct((rows, W), dtype),
        grid=grid,
        in_specs=[
            pl.BlockSpec(memory_space=pltpu.MemorySpace.SMEM),  # alpha scalar
            pl.BlockSpec((tm, W), lambda i: (i, 0)),            # x tile
        ],
        out_specs=pl.BlockSpec((tm, W), lambda i: (i, 0)),
        compiler_params=pltpu.CompilerParams(
            dimension_semantics=("parallel",),
        ),
    )(alpha_f32, x2)


def trelu(x: jax.Array, alpha) -> jax.Array:
    """Elementwise TReLU (max(x, alpha)) via Pallas; any shape/dtype."""
    orig_shape = x.shape
    dtype = x.dtype
    total = x.size
    alpha_f32 = jnp.asarray(alpha, dtype=jnp.float32).reshape((1,))

    if total == 0:
        return x

    flat = x.reshape(-1)

    # Widest 128-multiple lane width that divides the element count -> no
    # padding, no extra HBM round-trips (covers typical conv/linear sizes).
    W = next((w for w in (512, 256, 128) if total % w == 0), None)
    if W is not None:
        return _trelu_2d(flat.reshape(total // W, W), alpha_f32).reshape(orig_shape)

    # Awkward length: kernel handles the 128-divisible bulk; the tiny
    # (<128-element) tail is finished with plain jnp. Replaces the old
    # whole-tensor pad + slice which round-tripped everything through HBM.
    bulk = (total // 128) * 128
    a_native = alpha_f32[0].astype(dtype)
    if bulk == 0:
        # Sub-vreg tensor: not worth a kernel launch.
        return jnp.maximum(x, a_native)
    head = _trelu_2d(flat[:bulk].reshape(bulk // 128, 128), alpha_f32).reshape(-1)
    tail = jnp.maximum(flat[bulk:], a_native)
    return jnp.concatenate([head, tail]).reshape(orig_shape)


# ----------------------------------------------------------------------------
# Demo / self-test
# ----------------------------------------------------------------------------
if __name__ == "__main__":
    key = jax.random.PRNGKey(0)

    # NCHW activation at small shapes: batch=2, channels=4, spatial=16x16.
    x = jax.random.normal(key, (2, 4, 16, 16), dtype=jnp.float32)

    # alpha initialized to 0 (matches self.alpha.data.fill_(0)).
    alpha0 = jnp.zeros((1,), dtype=jnp.float32)
    y = trelu(x, alpha0)
    jax.block_until_ready(y)
    y_ref = jnp.maximum(x - alpha0[0], 0.0) + alpha0[0]
    assert jnp.allclose(y, y_ref, atol=1e-6), "mismatch vs reference (alpha=0)"

    # Nonzero alpha exercises the threshold path.
    alpha1 = jnp.array([0.25], dtype=jnp.float32)
    y1 = trelu(x, alpha1)
    jax.block_until_ready(y1)
    y1_ref = jnp.maximum(x - alpha1[0], 0.0) + alpha1[0]
    assert jnp.allclose(y1, y1_ref, atol=1e-6), "mismatch vs reference (alpha=0.25)"

    # Awkward (non-128-divisible) element count: bulk-kernel + jnp tail path.
    x_odd = jax.random.normal(jax.random.PRNGKey(1), (2, 3, 15, 17), dtype=jnp.float32)
    y_odd = trelu(x_odd, alpha1)
    jax.block_until_ready(y_odd)
    y_odd_ref = jnp.maximum(x_odd - alpha1[0], 0.0) + alpha1[0]
    assert jnp.allclose(y_odd, y_odd_ref, atol=1e-6), "mismatch vs reference (odd shape)"

    # bf16 input: native-dtype compute on v6e/v7x, f32-widened on v5.
    x_bf16 = jax.random.normal(jax.random.PRNGKey(2), (2, 4, 16, 16), dtype=jnp.bfloat16)
    y_bf16 = trelu(x_bf16, alpha1)
    jax.block_until_ready(y_bf16)
    y_bf16_ref = jnp.maximum(x_bf16, alpha1[0].astype(jnp.bfloat16))
    assert jnp.allclose(y_bf16.astype(jnp.float32), y_bf16_ref.astype(jnp.float32),
                        atol=1e-2), "mismatch vs reference (bf16)"

    print("KERNEL_OK")
</pallas_src>

<mosaic_0001>
module attributes {stable_mosaic.version = 11 : i64} {
  func.func @_trelu_kernel_native(%arg0: i32, %arg1: memref<1xf32, #tpu.memory_space<smem>>, %arg2: memref<4x512xf32, #tpu.memory_space<vmem>>, %arg3: memref<4x512xf32, #tpu.memory_space<vmem>>) attributes {dimension_semantics = [#tpu.dimension_semantics<parallel>], iteration_bounds = array<i64: 1>, scalar_prefetch = 0 : i64, scratch_operands = 0 : i64, tpu.core_type = #tpu.core_type<tc>, window_params = [{transform_indices = @transform_0, window_bounds = array<i64: 1>}, {transform_indices = @transform_1, window_bounds = array<i64: 4, 512>}, {transform_indices = @transform_2, window_bounds = array<i64: 4, 512>}]} {
    %c0 = arith.constant 0 : index
    %c0_0 = arith.constant 0 : index
    %0 = vector.load %arg2[%c0, %c0_0] : memref<4x512xf32, #tpu.memory_space<vmem>>, vector<4x512xf32>
    %c0_1 = arith.constant 0 : index
    %1 = memref.load %arg1[%c0_1] : memref<1xf32, #tpu.memory_space<smem>>
    %2 = vector.broadcast %1 : f32 to vector<4x512xf32>
    %3 = arith.maximumf %0, %2 : vector<4x512xf32>
    %c0_2 = arith.constant 0 : index
    %c0_3 = arith.constant 0 : index
    %4 = vector.load %arg3[%c0_2, %c0_3] : memref<4x512xf32, #tpu.memory_space<vmem>>, vector<4x512xf32>
    tpu.vector_store %arg3[%c0_2, %c0_3], %3 {strides = array<i32>} : memref<4x512xf32, #tpu.memory_space<vmem>>, vector<4x512xf32>,
    return
  }
  func.func @transform_0(%arg0: i32) -> i32 {
    %c0_i32 = arith.constant 0 : i32
    %c0_i32_0 = arith.constant 0 : i32
    return %c0_i32 : i32
  }
  func.func @transform_1(%arg0: i32) -> (i32, i32) {
    %c0_i32 = arith.constant 0 : i32
    %c0_i32_0 = arith.constant 0 : i32
    return %arg0, %c0_i32 : i32, i32
  }
  func.func @transform_2(%arg0: i32) -> (i32, i32) {
    %c0_i32 = arith.constant 0 : i32
    %c0_i32_0 = arith.constant 0 : i32
    return %arg0, %c0_i32 : i32, i32
  }
}

</mosaic_0001>

<llo_original>
// kernel: tpu_custom_call.1
$region0: #{tpu_custom_call.1}
  #allocation0 [shape = 'u32[]', space=smem, size = 0x4, offset = 0x4, fixed_abs, tag = 'smem constant byte address 0x4 - core index']
  #allocation1 [shape = 'u32[144,128]{1,0:T(1,128)}', space=vmem, size = 0x12000, scoped, tag = 'internal scratch']
  #allocation2 [shape = 'f32[1]{0:T(128)S(6)}', space=smem, size = 0x200, scoped, tag = 'scoped memory for tpu_custom_call.1']
  %s0 = inlined_call_operand.<no memory space> [shape: f32[1], index: 0, kind: input, shape index: {}]
  %s1 = inlined_call_operand.hbm [shape: f32[4,512], index: 1, kind: input, shape index: {}]
  %s2 = inlined_call_operand.hbm [shape: f32[4,512], index: 2, kind: output, shape index: {}]
  %s3 = sld [smem:[#allocation0]]
  $region22: #{tpu_custom_call.1} parent=0
    _
  %s5 = ssub.s32 1, %s3
  %s6 = scalar_select 0, %s5, %s3
  %7 = sst [smem:[#allocation2]] %s0
  $region1: #{tpu_custom_call.1} parent=0
    #allocation3 [shape = 'u8[8192]{0}', space=vmem, size = 0x2000, scoped, tag = 'input window, operand 1, single buffered']
    #allocation4 [shape = 's32[1]{0}', space=sflag, size = 0x4, scoped, tag = 'scoped memory for tpu_custom_call.1']
    #allocation5 [shape = 's32[1]{0}', space=sflag, size = 0x4, scoped, tag = 'scoped memory for tpu_custom_call.1']
    #allocation6 [shape = 'u8[8192]{0}', space=vmem, size = 0x2000, scoped, tag = 'output window, operand 0, single buffered']
    %8 = vsyncpa [#allocation4], 0
    %9 = vsyncpa [#allocation5], 0
    // Predicated region
    $region2: #{tpu_custom_call.1} parent=1 // pred_check
      _
    $region3: #{tpu_custom_call.1} parent=1 // pred_check_branch
      %11 = sbr.rel (0) target = $region5
    $region4: #{tpu_custom_call.1} parent=1 // pred_region
      _
    $region5: #{tpu_custom_call.1} parent=1 // pred_fallthru
      _
    // Predicated region
    $region6: #{tpu_custom_call.1} parent=1 // pred_check
      _
    $region7: #{tpu_custom_call.1} parent=1 // pred_check_branch
      %13 = sbr.rel (0) target = $region9
    $region8: #{tpu_custom_call.1} parent=1 // pred_region
      %s15 = ssub.s32 256, 256
      %16 = vsyncadd [#allocation4], %s15
      %s18 = sshll.u32 [#allocation3], 4
      %s19 = int_to_ptr.vmem [resolvable:$true] %s18
      %21 = dma.hbm_to_vmem [thread:$0]  %s1, 256, %s19, [#allocation4]
    $region9: #{tpu_custom_call.1} parent=1 // pred_fallthru
      _
    // Predicated region
    $region10: #{tpu_custom_call.1} parent=1 // pred_check
      _
    $region11: #{tpu_custom_call.1} parent=1 // pred_check_branch
      %23 = sbr.rel (0) target = $region13
    $region12: #{tpu_custom_call.1} parent=1 // pred_region
      %24 = dma.done [#allocation4], 256
    $region13: #{tpu_custom_call.1} parent=1 // pred_fallthru
      _
    %v25 = vld [vmem:[#allocation3] sm:$0xff]
    %v26 = vld [vmem:[#allocation3 + $0x8] sm:$0xff]
    %s27 = sld [smem:[#allocation2]]
    %v28 = vstv %s27
    %v29 = vmax.f32 %v25, %v28
    %v30 = vmax.f32 %v26, %v28
    %31 = vst [vmem:[#allocation6] sm:$0xff] %v29
    %32 = vst [vmem:[#allocation6 + $0x8] sm:$0xff] %v30
    // Predicated region
    $region14: #{tpu_custom_call.1} parent=1 // pred_check
      _
    $region15: #{tpu_custom_call.1} parent=1 // pred_check_branch
      %34 = sbr.rel (0) target = $region17
    $region16: #{tpu_custom_call.1} parent=1 // pred_region
      %s36 = ssub.s32 256, 256
      %37 = vsyncadd [#allocation5], %s36
      %s39 = sshll.u32 [#allocation6], 4
      %s40 = int_to_ptr.vmem [resolvable:$true] %s39
      %42 = dma.vmem_to_hbm [thread:$0]  %s40, 256, %s2, [#allocation5]
    $region17: #{tpu_custom_call.1} parent=1 // pred_fallthru
      _
    // Predicated region
    $region18: #{tpu_custom_call.1} parent=1 // pred_check
      _
    $region19: #{tpu_custom_call.1} parent=1 // pred_check_branch
      %44 = sbr.rel (0) target = $region21
    $region20: #{tpu_custom_call.1} parent=1 // pred_region
      %45 = dma.done [#allocation5], 256
    $region21: #{tpu_custom_call.1} parent=1 // pred_fallthru
      _
    %46 = vsyncpa [#allocation4], 1
    %47 = vsyncpa [#allocation5], 1

</llo_original>
